<compile_context>
chip_gen: v5e
topology: v5e:2x2
jax: 0.10.0
libtpu: 0.0.40
codegen_flags: <defaults>
</compile_context>

<pallas_src>
import numpy as np
import jax
import jax.numpy as jnp
from jax.experimental import pallas as pl
from jax.experimental.pallas import tpu as pltpu


# ----------------------------------------------------------------------------
# Fused kernel: SHT -> SHConv -> (ISHT + impulse, one matmul) -> BN -> ReLU
# ----------------------------------------------------------------------------
def down_fused_kernel(x_ref, yinv_ref, ybig_ref, wsh_ref, wblk_ref, gb_ref, o_ref):
    # x_ref    : (B*Cin, V)      input, batch folded into the matmul M dimension
    # yinv_ref : (V, Kp)         (Y_inv * area)^T, K zero-padded to Kp (lane-dense)
    # ybig_ref : (Kp, V)         ISHT basis Y, zero-padded rows for k >= K
    # wsh_ref  : (Cout, Cin, Kp) per-coefficient SHConv weights, zero-padded
    # wblk_ref : (B*Cout, B*Cin) block-diagonal 1x1-conv (impulse) weights
    # gb_ref   : (2, Cout, 1)    [gamma; beta]
    # o_ref    : (B, Cout, V)
    Cout, Cin, Kp = wsh_ref.shape
    BC, V = x_ref.shape
    B = BC // Cin

    x = x_ref[...]                                                      # (B*Cin, V)

    # --- SHT: one MXU matmul, M = B*Cin (area already folded into yinv) ---
    c = jnp.dot(x, yinv_ref[...], preferred_element_type=jnp.float32)   # (B*Cin, Kp)
    c = c.reshape(B, Cin, Kp)

    # --- SHConv: per-coefficient channel mixing, reduce over Cin (VPU, lane-dense Kp) ---
    sc = jnp.sum(c[:, None, :, :] * wsh_ref[...][None, :, :, :], axis=2)  # (B, Cout, Kp)
    sc_flat = sc.reshape(B * Cout, Kp)

    # --- merged ISHT + impulse: single MXU matmul over stacked contraction dims ---
    lhs = jnp.concatenate([sc_flat, wblk_ref[...]], axis=1)             # (B*Cout, Kp+B*Cin)
    rhs = jnp.concatenate([ybig_ref[...], x], axis=0)                   # (Kp+B*Cin, V)
    y = jnp.dot(lhs, rhs, preferred_element_type=jnp.float32)           # (B*Cout, V)
    y = y.reshape(B, Cout, V)

    # --- BatchNorm1d (batch stats, biased var, affine) + ReLU, single-pass stats ---
    inv_n = 1.0 / (B * V)
    s1 = jnp.sum(y, axis=(0, 2), keepdims=True)                         # (1, Cout, 1)
    s2 = jnp.sum(y * y, axis=(0, 2), keepdims=True)                     # (1, Cout, 1)
    mean = s1 * inv_n
    var = s2 * inv_n - mean * mean
    inv = jax.lax.rsqrt(var + 1e-5)
    gamma = gb_ref[0][None]                                             # (1, Cout, 1)
    beta = gb_ref[1][None]
    a = gamma * inv                                                     # folded scale
    b = beta - mean * a                                                 # folded bias
    o_ref[...] = jnp.maximum(y * a + b, 0.0).astype(o_ref.dtype)


# ----------------------------------------------------------------------------
# Wrapper
# ----------------------------------------------------------------------------
def down_forward(x, area, Y, Y_inv, w_sh_full, w_imp, gamma, beta):
    B, Cin, V = x.shape
    Cout, _, K = w_sh_full.shape
    Kp = ((K + 127) // 128) * 128  # pad coefficient axis to lane width

    f32 = jnp.float32
    # Fold the vertex-area weighting into the forward basis; zero-pad K -> Kp.
    yinv_t = (Y_inv * area[None, :]).T.astype(f32)                      # (V, K)
    yinv_p = jnp.zeros((V, Kp), f32).at[:, :K].set(yinv_t)
    y_pad = jnp.zeros((Kp, V), f32).at[:K, :].set(Y.astype(f32))
    wsh_p = jnp.zeros((Cout, Cin, Kp), f32).at[:, :, :K].set(w_sh_full.astype(f32))

    # Collapse batch into the matmul M dimension.
    x_flat = x.reshape(B * Cin, V).astype(f32)
    # Block-diagonal impulse (1x1 conv) weights so all batches share one matmul.
    wblk = jnp.kron(jnp.eye(B, dtype=f32), w_imp.astype(f32))           # (B*Cout, B*Cin)
    gb = jnp.stack([gamma, beta]).astype(f32)[..., None]                # (2, Cout, 1)

    vmem = pl.BlockSpec(memory_space=pltpu.MemorySpace.VMEM)
    return pl.pallas_call(
        down_fused_kernel,
        out_shape=jax.ShapeDtypeStruct((B, Cout, V), jnp.float32),
        in_specs=[vmem] * 6,
        out_specs=vmem,
    )(x_flat, yinv_p, y_pad, wsh_p, wblk, gb)


# ----------------------------------------------------------------------------
# Pure-JAX reference (mirrors the PyTorch forward semantics)
# ----------------------------------------------------------------------------
def down_reference(x, area, Y, Y_inv, w_sh_full, w_imp, gamma, beta):
    hp = jax.lax.Precision.HIGHEST
    xa = x * area[None, None, :]
    c = jnp.einsum("bcv,vk->bck", xa, Y_inv.T, precision=hp)       # SHT
    sc = jnp.einsum("bck,ock->bok", c, w_sh_full, precision=hp)    # SHConv
    y1 = jnp.einsum("bok,kv->bov", sc, Y, precision=hp)            # ISHT
    y2 = jnp.einsum("oc,bcv->bov", w_imp, x, precision=hp)         # impulse
    y = y1 + y2
    mean = jnp.mean(y, axis=(0, 2), keepdims=True)
    var = jnp.mean((y - mean) ** 2, axis=(0, 2), keepdims=True)    # biased
    yhat = (y - mean) * jax.lax.rsqrt(var + 1e-5)
    out = yhat * gamma[None, :, None] + beta[None, :, None]
    return jnp.maximum(out, 0.0)


if __name__ == "__main__":
    # Small, deterministic synthetic configuration.
    B, Cin, Cout = 2, 4, 8
    L = 7
    K = (L + 1) ** 2          # 64 SH coefficients
    V = 512                   # vertices (multiple of 128 -> lane friendly)

    key = jax.random.PRNGKey(0)
    k_x, k_y, k_yi, k_a, k_wsh, k_wimp, k_g, k_b = jax.random.split(key, 8)

    x = jax.random.normal(k_x, (B, Cin, V), dtype=jnp.float32)
    Y = jax.random.normal(k_y, (K, V), dtype=jnp.float32) * 0.1        # SH basis (synthetic)
    Y_inv = jax.random.normal(k_yi, (K, V), dtype=jnp.float32) * 0.1   # pseudo-inverse basis (synthetic)
    area = jax.random.uniform(k_a, (V,), dtype=jnp.float32, minval=0.5, maxval=1.5)

    # SHConv anchor weights: one per degree l (interval=1), expanded to per-coefficient
    # by repeating each degree's weight (2l+1) times (shared across orders m).
    w_sh = jax.random.normal(k_wsh, (Cout, Cin, L + 1), dtype=jnp.float32) * 0.2
    repeats = 2 * np.arange(L + 1) + 1            # sums to (L+1)^2
    degree_idx = np.repeat(np.arange(L + 1), repeats)
    w_sh_full = w_sh[:, :, degree_idx]            # (Cout, Cin, K)

    w_imp = jax.random.normal(k_wimp, (Cout, Cin), dtype=jnp.float32) * 0.2
    gamma = jax.random.uniform(k_g, (Cout,), dtype=jnp.float32, minval=0.5, maxval=1.5)
    beta = jax.random.normal(k_b, (Cout,), dtype=jnp.float32) * 0.1

    out = down_forward(x, area, Y, Y_inv, w_sh_full, w_imp, gamma, beta)
    out = jax.block_until_ready(out)

    ref = jax.block_until_ready(
        down_reference(x, area, Y, Y_inv, w_sh_full, w_imp, gamma, beta)
    )
    np.testing.assert_allclose(np.asarray(out), np.asarray(ref), rtol=2e-2, atol=2e-2)

    print("KERNEL_OK")
</pallas_src>

<mosaic_0001>
module attributes {stable_mosaic.version = 11 : i64} {
  func.func @down_fused_kernel(%arg0: memref<8x512xf32, #tpu.memory_space<vmem>>, %arg1: memref<512x128xf32, #tpu.memory_space<vmem>>, %arg2: memref<128x512xf32, #tpu.memory_space<vmem>>, %arg3: memref<8x4x128xf32, #tpu.memory_space<vmem>>, %arg4: memref<16x8xf32, #tpu.memory_space<vmem>>, %arg5: memref<2x8x1xf32, #tpu.memory_space<vmem>>, %arg6: memref<2x8x512xf32, #tpu.memory_space<vmem>>) attributes {dimension_semantics = [], scalar_prefetch = 0 : i64, scratch_operands = 0 : i64, tpu.core_type = #tpu.core_type<tc>} {
    %c0 = arith.constant 0 : index
    %c0_0 = arith.constant 0 : index
    %0 = vector.load %arg0[%c0, %c0_0] : memref<8x512xf32, #tpu.memory_space<vmem>>, vector<8x512xf32>
    %c0_1 = arith.constant 0 : index
    %c0_2 = arith.constant 0 : index
    %1 = vector.load %arg1[%c0_1, %c0_2] : memref<512x128xf32, #tpu.memory_space<vmem>>, vector<512x128xf32>
    %cst = arith.constant dense<0.000000e+00> : vector<8x128xf32>
    %2 = tpu.matmul %0, %1, %cst {dimension_numbers = #tpu.dot_dimension_numbers<[1], [0], [0], [1], [0, 0, 1, 1], [], []>} : vector<8x512xf32>, vector<512x128xf32>, vector<8x128xf32> -> vector<8x128xf32>
    %3 = vector.shape_cast %2 : vector<8x128xf32> to vector<2x4x128xf32>
    %4 = vector.shape_cast %3 : vector<2x4x128xf32> to vector<2x1x4x128xf32>
    %c0_3 = arith.constant 0 : index
    %c0_4 = arith.constant 0 : index
    %c0_5 = arith.constant 0 : index
    %5 = vector.load %arg3[%c0_3, %c0_4, %c0_5] : memref<8x4x128xf32, #tpu.memory_space<vmem>>, vector<8x4x128xf32>
    %6 = vector.shape_cast %5 : vector<8x4x128xf32> to vector<1x8x4x128xf32>
    %7 = vector.broadcast %4 : vector<2x1x4x128xf32> to vector<2x8x4x128xf32>
    %8 = vector.broadcast %6 : vector<1x8x4x128xf32> to vector<2x8x4x128xf32>
    %9 = arith.mulf %7, %8 : vector<2x8x4x128xf32>
    %cst_6 = arith.constant dense<0.000000e+00> : vector<2x8x128xf32>
    %10 = vector.multi_reduction <add>, %9, %cst_6 [2] : vector<2x8x4x128xf32> to vector<2x8x128xf32>
    %11 = vector.shape_cast %10 : vector<2x8x128xf32> to vector<16x128xf32>
    %c0_7 = arith.constant 0 : index
    %c0_8 = arith.constant 0 : index
    %12 = vector.load %arg4[%c0_7, %c0_8] : memref<16x8xf32, #tpu.memory_space<vmem>>, vector<16x8xf32>
    %13 = tpu.concatenate %11, %12 in 1 : vector<16x128xf32>, vector<16x8xf32> -> vector<16x136xf32>
    %c0_9 = arith.constant 0 : index
    %c0_10 = arith.constant 0 : index
    %14 = vector.load %arg2[%c0_9, %c0_10] : memref<128x512xf32, #tpu.memory_space<vmem>>, vector<128x512xf32>
    %15 = tpu.concatenate %14, %0 in 0 : vector<128x512xf32>, vector<8x512xf32> -> vector<136x512xf32>
    %cst_11 = arith.constant dense<0.000000e+00> : vector<16x512xf32>
    %16 = tpu.matmul %13, %15, %cst_11 {dimension_numbers = #tpu.dot_dimension_numbers<[1], [0], [0], [1], [0, 0, 1, 1], [], []>} : vector<16x136xf32>, vector<136x512xf32>, vector<16x512xf32> -> vector<16x512xf32>
    %17 = vector.shape_cast %16 : vector<16x512xf32> to vector<2x8x512xf32>
    %cst_12 = arith.constant dense<0.000000e+00> : vector<8xf32>
    %18 = vector.multi_reduction <add>, %17, %cst_12 [0, 2] : vector<2x8x512xf32> to vector<8xf32>
    %19 = vector.shape_cast %18 : vector<8xf32> to vector<1x8x1xf32>
    %20 = arith.mulf %17, %17 : vector<2x8x512xf32>
    %cst_13 = arith.constant dense<0.000000e+00> : vector<8xf32>
    %21 = vector.multi_reduction <add>, %20, %cst_13 [0, 2] : vector<2x8x512xf32> to vector<8xf32>
    %22 = vector.shape_cast %21 : vector<8xf32> to vector<1x8x1xf32>
    %cst_14 = arith.constant 9.765625E-4 : f32
    %23 = vector.broadcast %cst_14 : f32 to vector<1x8x1xf32>
    %24 = arith.mulf %19, %23 : vector<1x8x1xf32>
    %cst_15 = arith.constant 9.765625E-4 : f32
    %25 = vector.broadcast %cst_15 : f32 to vector<1x8x1xf32>
    %26 = arith.mulf %22, %25 : vector<1x8x1xf32>
    %27 = arith.mulf %24, %24 : vector<1x8x1xf32>
    %28 = arith.subf %26, %27 : vector<1x8x1xf32>
    %cst_16 = arith.constant 9.99999974E-6 : f32
    %29 = vector.broadcast %cst_16 : f32 to vector<1x8x1xf32>
    %30 = arith.addf %28, %29 : vector<1x8x1xf32>
    %31 = math.rsqrt %30 : vector<1x8x1xf32>
    %c0_17 = arith.constant 0 : index
    %c0_18 = arith.constant 0 : index
    %c0_19 = arith.constant 0 : index
    %32 = vector.load %arg5[%c0_17, %c0_18, %c0_19] : memref<2x8x1xf32, #tpu.memory_space<vmem>>, vector<1x8x1xf32>
    %33 = vector.shape_cast %32 : vector<1x8x1xf32> to vector<8x1xf32>
    %34 = vector.shape_cast %33 : vector<8x1xf32> to vector<1x8x1xf32>
    %c1 = arith.constant 1 : index
    %c0_20 = arith.constant 0 : index
    %c0_21 = arith.constant 0 : index
    %35 = vector.load %arg5[%c1, %c0_20, %c0_21] : memref<2x8x1xf32, #tpu.memory_space<vmem>>, vector<1x8x1xf32>
    %36 = vector.shape_cast %35 : vector<1x8x1xf32> to vector<8x1xf32>
    %37 = vector.shape_cast %36 : vector<8x1xf32> to vector<1x8x1xf32>
    %38 = arith.mulf %34, %31 : vector<1x8x1xf32>
    %39 = arith.mulf %24, %38 : vector<1x8x1xf32>
    %40 = arith.subf %37, %39 : vector<1x8x1xf32>
    %41 = vector.broadcast %38 : vector<1x8x1xf32> to vector<2x8x512xf32>
    %42 = arith.mulf %17, %41 : vector<2x8x512xf32>
    %43 = vector.broadcast %40 : vector<1x8x1xf32> to vector<2x8x512xf32>
    %44 = arith.addf %42, %43 : vector<2x8x512xf32>
    %cst_22 = arith.constant 0.000000e+00 : f32
    %45 = vector.broadcast %cst_22 : f32 to vector<2x8x512xf32>
    %46 = arith.maximumf %44, %45 : vector<2x8x512xf32>
    %c0_23 = arith.constant 0 : index
    %c0_24 = arith.constant 0 : index
    %c0_25 = arith.constant 0 : index
    %47 = vector.load %arg6[%c0_23, %c0_24, %c0_25] : memref<2x8x512xf32, #tpu.memory_space<vmem>>, vector<2x8x512xf32>
    tpu.vector_store %arg6[%c0_23, %c0_24, %c0_25], %46 {strides = array<i32>} : memref<2x8x512xf32, #tpu.memory_space<vmem>>, vector<2x8x512xf32>,
    return
  }
}

</mosaic_0001>

<llo_original>
// kernel: tpu_custom_call.1
$region0: #{tpu_custom_call.1}
  #allocation0 [shape = 'u32[]', space=smem, size = 0x4, offset = 0x4, fixed_abs, tag = 'smem constant byte address 0x4 - core index']
  #allocation1 [shape = 'u32[72,128]{1,0:T(1,128)}', space=vmem, size = 0x9000, scoped, tag = 'internal scratch']
  %s0 = inlined_call_operand.vmem [shape: f32[8,512], index: 0, kind: input, shape index: {}]
  %s1 = inlined_call_operand.hbm [shape: f32[512,128], index: 1, kind: input, shape index: {}]
  %s2 = inlined_call_operand.hbm [shape: f32[128,512], index: 2, kind: input, shape index: {}]
  %s3 = inlined_call_operand.hbm [shape: f32[8,4,128], index: 3, kind: input, shape index: {}]
  %s4 = inlined_call_operand.vmem [shape: f32[16,8], index: 4, kind: input, shape index: {}]
  %s5 = inlined_call_operand.vmem [shape: f32[2,8,1], index: 5, kind: input, shape index: {}]
  %s6 = inlined_call_operand.hbm [shape: f32[2,8,512], index: 6, kind: output, shape index: {}]
  %s7 = sld [smem:[#allocation0]]
  $region46: #{tpu_custom_call.1} parent=0
    _
  %s9 = ssub.s32 1, %s7
  %s10 = scalar_select 0, %s9, %s7
  $region1: #{tpu_custom_call.1} parent=0
    #allocation2 [shape = 'u8[262144]{0}', space=vmem, size = 0x40000, scoped, tag = 'input window, operand 1, single buffered']
    #allocation3 [shape = 's32[1]{0}', space=sflag, size = 0x4, scoped, tag = 'scoped memory for tpu_custom_call.1']
    #allocation4 [shape = 's32[1]{0}', space=sflag, size = 0x4, scoped, tag = 'scoped memory for tpu_custom_call.1']
    #allocation5 [shape = 'u8[262144]{0}', space=vmem, size = 0x40000, scoped, tag = 'input window, operand 2, single buffered']
    #allocation6 [shape = 's32[1]{0}', space=sflag, size = 0x4, scoped, tag = 'scoped memory for tpu_custom_call.1']
    #allocation7 [shape = 'u8[16384]{0}', space=vmem, size = 0x4000, scoped, tag = 'input window, operand 3, single buffered']
    #allocation8 [shape = 'u8[32768]{0}', space=vmem, size = 0x8000, scoped, tag = 'output window, operand 0, single buffered']
    %11 = vsyncpa [#allocation3], 0
    %12 = vsyncpa [#allocation6], 0
    %13 = vsyncpa [#allocation4], 0
    // Predicated region
    $region2: #{tpu_custom_call.1} parent=1 // pred_check
      _
    $region3: #{tpu_custom_call.1} parent=1 // pred_check_branch
      %15 = sbr.rel (0) target = $region5
    $region4: #{tpu_custom_call.1} parent=1 // pred_region
      _
    $region5: #{tpu_custom_call.1} parent=1 // pred_fallthru
      _
    // Predicated region
    $region6: #{tpu_custom_call.1} parent=1 // pred_check
      _
    $region7: #{tpu_custom_call.1} parent=1 // pred_check_branch
      %17 = sbr.rel (0) target = $region9
    $region8: #{tpu_custom_call.1} parent=1 // pred_region
      %19 = vsyncadd [#allocation3], 0
      %s20 = sshll.u32 %s1, 4
      %s21 = int_to_ptr.hbm [resolvable:$true] %s20
      %s22 = sshll.u32 [#allocation2], 4
      %s23 = int_to_ptr.vmem [resolvable:$true] %s22
      %28 = dma.hbm_to_vmem [thread:$0]  %s21, 8192, %s23, [#allocation3], 128, 128, 8
    $region9: #{tpu_custom_call.1} parent=1 // pred_fallthru
      _
    // Predicated region
    $region10: #{tpu_custom_call.1} parent=1 // pred_check
      _
    $region11: #{tpu_custom_call.1} parent=1 // pred_check_branch
      %30 = sbr.rel (0) target = $region13
    $region12: #{tpu_custom_call.1} parent=1 // pred_region
      %32 = vsyncadd [#allocation6], 0
      %s33 = sshll.u32 %s2, 4
      %s34 = int_to_ptr.hbm [resolvable:$true] %s33
      %s35 = sshll.u32 [#allocation5], 4
      %s36 = int_to_ptr.vmem [resolvable:$true] %s35
      %41 = dma.hbm_to_vmem [thread:$0]  %s34, 8192, %s36, [#allocation6], 512, 512, 32
    $region13: #{tpu_custom_call.1} parent=1 // pred_fallthru
      _
    // Predicated region
    $region14: #{tpu_custom_call.1} parent=1 // pred_check
      _
    $region15: #{tpu_custom_call.1} parent=1 // pred_check_branch
      %43 = sbr.rel (0) target = $region17
    $region16: #{tpu_custom_call.1} parent=1 // pred_region
      %45 = vsyncadd [#allocation6], 0
      %s46 = sshll.u32 %s3, 4
      %s47 = int_to_ptr.hbm [resolvable:$true] %s46
      %s48 = sshll.u32 [#allocation7], 4
      %s49 = int_to_ptr.vmem [resolvable:$true] %s48
      %54 = dma.hbm_to_vmem [thread:$0]  %s47, 512, %s49, [#allocation6], 64, 64, 4
    $region17: #{tpu_custom_call.1} parent=1 // pred_fallthru
      _
    // Predicated region
    $region18: #{tpu_custom_call.1} parent=1 // pred_check
      _
    $region19: #{tpu_custom_call.1} parent=1 // pred_check_branch
      %56 = sbr.rel (0) target = $region21
    $region20: #{tpu_custom_call.1} parent=1 // pred_region
      _
    $region21: #{tpu_custom_call.1} parent=1 // pred_fallthru
      _
    // Predicated region
    $region22: #{tpu_custom_call.1} parent=1 // pred_check
      _
    $region23: #{tpu_custom_call.1} parent=1 // pred_check_branch
      %58 = sbr.rel (0) target = $region25
    $region24: #{tpu_custom_call.1} parent=1 // pred_region
      _
    $region25: #{tpu_custom_call.1} parent=1 // pred_fallthru
      _
    // Predicated region
    $region26: #{tpu_custom_call.1} parent=1 // pred_check
      _
    $region27: #{tpu_custom_call.1} parent=1 // pred_check_branch
      %60 = sbr.rel (0) target = $region29
    $region28: #{tpu_custom_call.1} parent=1 // pred_region
      %62 = dma.done [#allocation3], 8192
    $region29: #{tpu_custom_call.1} parent=1 // pred_fallthru
      _
    // Predicated region
    $region30: #{tpu_custom_call.1} parent=1 // pred_check
      _
    $region31: #{tpu_custom_call.1} parent=1 // pred_check_branch
      %64 = sbr.rel (0) target = $region33
    $region32: #{tpu_custom_call.1} parent=1 // pred_region
      %66 = dma.done [#allocation6], 8192
    $region33: #{tpu_custom_call.1} parent=1 // pred_fallthru
      _
    // Predicated region
    $region34: #{tpu_custom_call.1} parent=1 // pred_check
      _
    $region35: #{tpu_custom_call.1} parent=1 // pred_check_branch
      %68 = sbr.rel (0) target = $region37
    $region36: #{tpu_custom_call.1} parent=1 // pred_region
      %70 = dma.done [#allocation6], 512
    $region37: #{tpu_custom_call.1} parent=1 // pred_fallthru
      _
    %v71 = vld [vmem:[%s0] sm:$0xff]
    %v72 = vld [vmem:[%s0 + $0x8] sm:$0xff]
    %v73 = vld [vmem:[%s0 + $0x10] sm:$0xff]
    %v74 = vld [vmem:[%s0 + $0x18] sm:$0xff]
    %v75 = vld [vmem:[#allocation2] sm:$0xff]
    %v76 = vld [vmem:[#allocation2 + $0x8] sm:$0xff]
    %v77 = vld [vmem:[#allocation2 + $0x10] sm:$0xff]
    %v78 = vld [vmem:[#allocation2 + $0x18] sm:$0xff]
    %v79 = vld [vmem:[#allocation2 + $0x20] sm:$0xff]
    %v80 = vld [vmem:[#allocation2 + $0x28] sm:$0xff]
    %v81 = vld [vmem:[#allocation2 + $0x30] sm:$0xff]
    %v82 = vld [vmem:[#allocation2 + $0x38] sm:$0xff]
    %v83 = vld [vmem:[#allocation2 + $0x40] sm:$0xff]
    %v84 = vld [vmem:[#allocation2 + $0x48] sm:$0xff]
    %v85 = vld [vmem:[#allocation2 + $0x50] sm:$0xff]
    %v86 = vld [vmem:[#allocation2 + $0x58] sm:$0xff]
    %v87 = vld [vmem:[#allocation2 + $0x60] sm:$0xff]
    %v88 = vld [vmem:[#allocation2 + $0x68] sm:$0xff]
    %v89 = vld [vmem:[#allocation2 + $0x70] sm:$0xff]
    %v90 = vld [vmem:[#allocation2 + $0x78] sm:$0xff]
    %v91 = vld [vmem:[#allocation2 + $0x80] sm:$0xff]
    %v92 = vld [vmem:[#allocation2 + $0x88] sm:$0xff]
    %v93 = vld [vmem:[#allocation2 + $0x90] sm:$0xff]
    %v94 = vld [vmem:[#allocation2 + $0x98] sm:$0xff]
    %v95 = vld [vmem:[#allocation2 + $0xa0] sm:$0xff]
    %v96 = vld [vmem:[#allocation2 + $0xa8] sm:$0xff]
    %v97 = vld [vmem:[#allocation2 + $0xb0] sm:$0xff]
    %v98 = vld [vmem:[#allocation2 + $0xb8] sm:$0xff]
    %v99 = vld [vmem:[#allocation2 + $0xc0] sm:$0xff]
    %v100 = vld [vmem:[#allocation2 + $0xc8] sm:$0xff]
    %v101 = vld [vmem:[#allocation2 + $0xd0] sm:$0xff]
    %v102 = vld [vmem:[#allocation2 + $0xd8] sm:$0xff]
    %v103 = vld [vmem:[#allocation2 + $0xe0] sm:$0xff]
    %v104 = vld [vmem:[#allocation2 + $0xe8] sm:$0xff]
    %v105 = vld [vmem:[#allocation2 + $0xf0] sm:$0xff]
    %v106 = vld [vmem:[#allocation2 + $0xf8] sm:$0xff]
    %v107 = vld [vmem:[#allocation2 + $0x100] sm:$0xff]
    %v108 = vld [vmem:[#allocation2 + $0x108] sm:$0xff]
    %v109 = vld [vmem:[#allocation2 + $0x110] sm:$0xff]
    %v110 = vld [vmem:[#allocation2 + $0x118] sm:$0xff]
    %v111 = vld [vmem:[#allocation2 + $0x120] sm:$0xff]
    %v112 = vld [vmem:[#allocation2 + $0x128] sm:$0xff]
    %v113 = vld [vmem:[#allocation2 + $0x130] sm:$0xff]
    %v114 = vld [vmem:[#allocation2 + $0x138] sm:$0xff]
    %v115 = vld [vmem:[#allocation2 + $0x140] sm:$0xff]
    %v116 = vld [vmem:[#allocation2 + $0x148] sm:$0xff]
    %v117 = vld [vmem:[#allocation2 + $0x150] sm:$0xff]
    %v118 = vld [vmem:[#allocation2 + $0x158] sm:$0xff]
    %v119 = vld [vmem:[#allocation2 + $0x160] sm:$0xff]
    %v120 = vld [vmem:[#allocation2 + $0x168] sm:$0xff]
    %v121 = vld [vmem:[#allocation2 + $0x170] sm:$0xff]
    %v122 = vld [vmem:[#allocation2 + $0x178] sm:$0xff]
    %v123 = vld [vmem:[#allocation2 + $0x180] sm:$0xff]
    %v124 = vld [vmem:[#allocation2 + $0x188] sm:$0xff]
    %v125 = vld [vmem:[#allocation2 + $0x190] sm:$0xff]
    %v126 = vld [vmem:[#allocation2 + $0x198] sm:$0xff]
    %v127 = vld [vmem:[#allocation2 + $0x1a0] sm:$0xff]
    %v128 = vld [vmem:[#allocation2 + $0x1a8] sm:$0xff]
    %v129 = vld [vmem:[#allocation2 + $0x1b0] sm:$0xff]
    %v130 = vld [vmem:[#allocation2 + $0x1b8] sm:$0xff]
    %v131 = vld [vmem:[#allocation2 + $0x1c0] sm:$0xff]
    %v132 = vld [vmem:[#allocation2 + $0x1c8] sm:$0xff]
    %v133 = vld [vmem:[#allocation2 + $0x1d0] sm:$0xff]
    %v134 = vld [vmem:[#allocation2 + $0x1d8] sm:$0xff]
    %v135 = vld [vmem:[#allocation2 + $0x1e0] sm:$0xff]
    %v136 = vld [vmem:[#allocation2 + $0x1e8] sm:$0xff]
    %v137 = vld [vmem:[#allocation2 + $0x1f0] sm:$0xff]
    %v138 = vld [vmem:[#allocation2 + $0x1f8] sm:$0xff]
    %139 = vmatpush.msra.mxu0 %v90
    %140 = vmatpush.msra.mxu0 %v89
    %141 = vmatpush.msra.mxu0 %v88
    %142 = vmatpush.msra.mxu0 %v87
    %143 = vmatpush.msra.mxu0 %v86
    %144 = vmatpush.msra.mxu0 %v85
    %145 = vmatpush.msra.mxu0 %v84
    %146 = vmatpush.msra.mxu0 %v83
    %147 = vmatpush.msra.mxu0 %v82
    %148 = vmatpush.msra.mxu0 %v81
    %149 = vmatpush.msra.mxu0 %v80
    %150 = vmatpush.msra.mxu0 %v79
    %151 = vmatpush.msra.mxu0 %v78
    %152 = vmatpush.msra.mxu0 %v77
    %153 = vmatpush.msra.mxu0 %v76
    %154 = vmatpush.msra.mxu0 %v75
    %155 = vmatmul.f32.gmra.mxu0 %v71
    %v156 = vpop.f32.mrf.mxu0
    %v157 = vadd.f32 0.0, %v156
    %158 = vdwg.mxu0
    %159 = vmatpush.msra.mxu0 %v106
    %160 = vmatpush.msra.mxu0 %v105
    %161 = vmatpush.msra.mxu0 %v104
    %162 = vmatpush.msra.mxu0 %v103
    %163 = vmatpush.msra.mxu0 %v102
    %164 = vmatpush.msra.mxu0 %v101
    %165 = vmatpush.msra.mxu0 %v100
    %166 = vmatpush.msra.mxu0 %v99
    %167 = vmatpush.msra.mxu0 %v98
    %168 = vmatpush.msra.mxu0 %v97
    %169 = vmatpush.msra.mxu0 %v96
    %170 = vmatpush.msra.mxu0 %v95
    %171 = vmatpush.msra.mxu0 %v94
    %172 = vmatpush.msra.mxu0 %v93
    %173 = vmatpush.msra.mxu0 %v92
    %174 = vmatpush.msra.mxu0 %v91
    %175 = vmatmul.f32.gmra.mxu0 %v72
    %v176 = vpop.f32.mrf.mxu0
    %v177 = vadd.f32 %v157, %v176
    %178 = vdwg.mxu0
    %179 = vmatpush.msra.mxu0 %v122
    %180 = vmatpush.msra.mxu0 %v121
    %181 = vmatpush.msra.mxu0 %v120
    %182 = vmatpush.msra.mxu0 %v119
    %183 = vmatpush.msra.mxu0 %v118
    %184 = vmatpush.msra.mxu0 %v117
    %185 = vmatpush.msra.mxu0 %v116
    %186 = vmatpush.msra.mxu0 %v115
    %187 = vmatpush.msra.mxu0 %v114
    %188 = vmatpush.msra.mxu0 %v113
    %189 = vmatpush.msra.mxu0 %v112
    %190 = vmatpush.msra.mxu0 %v111
    %191 = vmatpush.msra.mxu0 %v110
    %192 = vmatpush.msra.mxu0 %v109
    %193 = vmatpush.msra.mxu0 %v108
    %194 = vmatpush.msra.mxu0 %v107
    %195 = vmatmul.f32.gmra.mxu0 %v73
    %v196 = vpop.f32.mrf.mxu0
    %v197 = vadd.f32 %v177, %v196
    %198 = vdwg.mxu0
    %199 = vmatpush.msra.mxu0 %v138
    %200 = vmatpush.msra.mxu0 %v137
    %201 = vmatpush.msra.mxu0 %v136
    %202 = vmatpush.msra.mxu0 %v135
    %203 = vmatpush.msra.mxu0 %v134
    %204 = vmatpush.msra.mxu0 %v133
    %205 = vmatpush.msra.mxu0 %v132
    %206 = vmatpush.msra.mxu0 %v131
    %207 = vmatpush.msra.mxu0 %v130
    %208 = vmatpush.msra.mxu0 %v129
    %209 = vmatpush.msra.mxu0 %v128
    %210 = vmatpush.msra.mxu0 %v127
    %211 = vmatpush.msra.mxu0 %v126
    %212 = vmatpush.msra.mxu0 %v125
    %213 = vmatpush.msra.mxu0 %v124
    %214 = vmatpush.msra.mxu0 %v123
    %215 = vmatmul.f32.gmra.mxu0 %v74
    %v216 = vpop.f32.mrf.mxu0
    %v217 = vadd.f32 %v197, %v216
    %218 = vdwg.mxu0
    %v220 = vrot.slane %v217, 4
    %v222 = vld [vmem:[#allocation7] sm:$0xf]
    %v223 = vld [vmem:[#allocation7 + $0x4] sm:$0xf]
    %v224 = vld [vmem:[#allocation7 + $0x8] sm:$0xf]
    %v225 = vld [vmem:[#allocation7 + $0xc] sm:$0xf]
    %v226 = vld [vmem:[#allocation7 + $0x10] sm:$0xf]
    %v227 = vld [vmem:[#allocation7 + $0x14] sm:$0xf]
    %v228 = vld [vmem:[#allocation7 + $0x18] sm:$0xf]
    %v229 = vld [vmem:[#allocation7 + $0x1c] sm:$0xf]
    %v230 = vmul.f32 %v217, %v222
    %v231 = vmul.f32 %v217, %v223
    %v232 = vmul.f32 %v217, %v224
    %v233 = vmul.f32 %v217, %v225
    %v234 = vmul.f32 %v217, %v226
    %v235 = vmul.f32 %v217, %v227
    %v236 = vmul.f32 %v217, %v228
    %v237 = vmul.f32 %v217, %v229
    %v238 = vmul.f32 %v220, %v222
    %v239 = vmul.f32 %v220, %v223
    %v240 = vmul.f32 %v220, %v224
    %v241 = vmul.f32 %v220, %v225
    %v242 = vmul.f32 %v220, %v226
    %v243 = vmul.f32 %v220, %v227
    %v244 = vmul.f32 %v220, %v228
    %v245 = vmul.f32 %v220, %v229
    %vm246 = vcmask 1043456
    %v247 = vsel %vm246, %v230, 0.0
    %v248 = vrot.slane %v247, 4
    %v249 = vadd.f32 %v247, %v248
    %v250 = vrot.slane %v249, 2
    %v251 = vadd.f32 %v249, %v250
    %v252 = vrot.slane %v251, 1
    %v253 = vadd.f32 %v251, %v252
    %v254 = vsel %vm246, %v231, 0.0
    %v255 = vrot.slane %v254, 4
    %v256 = vadd.f32 %v254, %v255
    %v257 = vrot.slane %v256, 2
    %v258 = vadd.f32 %v256, %v257
    %v259 = vrot.slane %v258, 1
    %v260 = vadd.f32 %v258, %v259
    %v261 = vsel %vm246, %v232, 0.0
    %v262 = vrot.slane %v261, 4
    %v263 = vadd.f32 %v261, %v262
    %v264 = vrot.slane %v263, 2
    %v265 = vadd.f32 %v263, %v264
    %v266 = vrot.slane %v265, 1
    %v267 = vadd.f32 %v265, %v266
    %v268 = vsel %vm246, %v233, 0.0
    %v269 = vrot.slane %v268, 4
    %v270 = vadd.f32 %v268, %v269
    %v271 = vrot.slane %v270, 2
    %v272 = vadd.f32 %v270, %v271
    %v273 = vrot.slane %v272, 1
    %v274 = vadd.f32 %v272, %v273
    %v275 = vsel %vm246, %v234, 0.0
    %v276 = vrot.slane %v275, 4
    %v277 = vadd.f32 %v275, %v276
    %v278 = vrot.slane %v277, 2
    %v279 = vadd.f32 %v277, %v278
    %v280 = vrot.slane %v279, 1
    %v281 = vadd.f32 %v279, %v280
    %v282 = vsel %vm246, %v235, 0.0
    %v283 = vrot.slane %v282, 4
    %v284 = vadd.f32 %v282, %v283
    %v285 = vrot.slane %v284, 2
    %v286 = vadd.f32 %v284, %v285
    %v287 = vrot.slane %v286, 1
    %v288 = vadd.f32 %v286, %v287
    %v289 = vsel %vm246, %v236, 0.0
    %v290 = vrot.slane %v289, 4
    %v291 = vadd.f32 %v289, %v290
    %v292 = vrot.slane %v291, 2
    %v293 = vadd.f32 %v291, %v292
    %v294 = vrot.slane %v293, 1
    %v295 = vadd.f32 %v293, %v294
    %v296 = vsel %vm246, %v237, 0.0
    %v297 = vrot.slane %v296, 4
    %v298 = vadd.f32 %v296, %v297
    %v299 = vrot.slane %v298, 2
    %v300 = vadd.f32 %v298, %v299
    %v301 = vrot.slane %v300, 1
    %v302 = vadd.f32 %v300, %v301
    %v303 = vsel %vm246, %v238, 0.0
    %v304 = vrot.slane %v303, 4
    %v305 = vadd.f32 %v303, %v304
    %v306 = vrot.slane %v305, 2
    %v307 = vadd.f32 %v305, %v306
    %v308 = vrot.slane %v307, 1
    %v309 = vadd.f32 %v307, %v308
    %v310 = vsel %vm246, %v239, 0.0
    %v311 = vrot.slane %v310, 4
    %v312 = vadd.f32 %v310, %v311
    %v313 = vrot.slane %v312, 2
    %v314 = vadd.f32 %v312, %v313
    %v315 = vrot.slane %v314, 1
    %v316 = vadd.f32 %v314, %v315
    %v317 = vsel %vm246, %v240, 0.0
    %v318 = vrot.slane %v317, 4
    %v319 = vadd.f32 %v317, %v318
    %v320 = vrot.slane %v319, 2
    %v321 = vadd.f32 %v319, %v320
    %v322 = vrot.slane %v321, 1
    %v323 = vadd.f32 %v321, %v322
    %v324 = vsel %vm246, %v241, 0.0
    %v325 = vrot.slane %v324, 4
    %v326 = vadd.f32 %v324, %v325
    %v327 = vrot.slane %v326, 2
    %v328 = vadd.f32 %v326, %v327
    %v329 = vrot.slane %v328, 1
    %v330 = vadd.f32 %v328, %v329
    %v331 = vsel %vm246, %v242, 0.0
    %v332 = vrot.slane %v331, 4
    %v333 = vadd.f32 %v331, %v332
    %v334 = vrot.slane %v333, 2
    %v335 = vadd.f32 %v333, %v334
    %v336 = vrot.slane %v335, 1
    %v337 = vadd.f32 %v335, %v336
    %v338 = vsel %vm246, %v243, 0.0
    %v339 = vrot.slane %v338, 4
    %v340 = vadd.f32 %v338, %v339
    %v341 = vrot.slane %v340, 2
    %v342 = vadd.f32 %v340, %v341
    %v343 = vrot.slane %v342, 1
    %v344 = vadd.f32 %v342, %v343
    %v345 = vsel %vm246, %v244, 0.0
    %v346 = vrot.slane %v345, 4
    %v347 = vadd.f32 %v345, %v346
    %v348 = vrot.slane %v347, 2
    %v349 = vadd.f32 %v347, %v348
    %v350 = vrot.slane %v349, 1
    %v351 = vadd.f32 %v349, %v350
    %v352 = vsel %vm246, %v245, 0.0
    %v353 = vrot.slane %v352, 4
    %v354 = vadd.f32 %v352, %v353
    %v355 = vrot.slane %v354, 2
    %v356 = vadd.f32 %v354, %v355
    %v357 = vrot.slane %v356, 1
    %v358 = vadd.f32 %v356, %v357
    %v359 = vld [vmem:[%s4] sm:$0xff]
    %v360 = vld [vmem:[%s4 + $0x8] sm:$0xff]
    %vm377 = vcmask 1041409
    %v378 = vsel %vm377, %v260, %v253
    %vm379 = vcmask 1042434
    %v380 = vsel %vm379, %v267, %v378
    %vm381 = vcmask 1043459
    %v382 = vsel %vm381, %v274, %v380
    %vm383 = vcmask 1044484
    %v384 = vsel %vm383, %v281, %v382
    %vm385 = vcmask 1045509
    %v386 = vsel %vm385, %v288, %v384
    %vm387 = vcmask 1046534
    %v388 = vsel %vm387, %v295, %v386
    %vm389 = vcmask 1047559
    %v390 = vsel %vm389, %v302, %v388
    %v391 = vsel %vm377, %v316, %v309
    %v392 = vsel %vm379, %v323, %v391
    %v393 = vsel %vm381, %v330, %v392
    %v394 = vsel %vm383, %v337, %v393
    %v395 = vsel %vm385, %v344, %v394
    %v396 = vsel %vm387, %v351, %v395
    %v397 = vsel %vm389, %v358, %v396
    %v400 = vld [vmem:[#allocation5] sm:$0xff]
    %v401 = vld [vmem:[#allocation5 + $0x8] sm:$0xff]
    %v402 = vld [vmem:[#allocation5 + $0x10] sm:$0xff]
    %v403 = vld [vmem:[#allocation5 + $0x18] sm:$0xff]
    %v404 = vld [vmem:[#allocation5 + $0x20] sm:$0xff]
    %v405 = vld [vmem:[#allocation5 + $0x28] sm:$0xff]
    %v406 = vld [vmem:[#allocation5 + $0x30] sm:$0xff]
    %v407 = vld [vmem:[#allocation5 + $0x38] sm:$0xff]
    %v408 = vld [vmem:[#allocation5 + $0x40] sm:$0xff]
    %v409 = vld [vmem:[#allocation5 + $0x48] sm:$0xff]
    %v410 = vld [vmem:[#allocation5 + $0x50] sm:$0xff]
    %v411 = vld [vmem:[#allocation5 + $0x58] sm:$0xff]
    %v412 = vld [vmem:[#allocation5 + $0x60] sm:$0xff]
    %v413 = vld [vmem:[#allocation5 + $0x68] sm:$0xff]
    %v414 = vld [vmem:[#allocation5 + $0x70] sm:$0xff]
    %v415 = vld [vmem:[#allocation5 + $0x78] sm:$0xff]
    %v416 = vld [vmem:[#allocation5 + $0x80] sm:$0xff]
    %v417 = vld [vmem:[#allocation5 + $0x88] sm:$0xff]
    %v418 = vld [vmem:[#allocation5 + $0x90] sm:$0xff]
    %v419 = vld [vmem:[#allocation5 + $0x98] sm:$0xff]
    %v420 = vld [vmem:[#allocation5 + $0xa0] sm:$0xff]
    %v421 = vld [vmem:[#allocation5 + $0xa8] sm:$0xff]
    %v422 = vld [vmem:[#allocation5 + $0xb0] sm:$0xff]
    %v423 = vld [vmem:[#allocation5 + $0xb8] sm:$0xff]
    %v424 = vld [vmem:[#allocation5 + $0xc0] sm:$0xff]
    %v425 = vld [vmem:[#allocation5 + $0xc8] sm:$0xff]
    %v426 = vld [vmem:[#allocation5 + $0xd0] sm:$0xff]
    %v427 = vld [vmem:[#allocation5 + $0xd8] sm:$0xff]
    %v428 = vld [vmem:[#allocation5 + $0xe0] sm:$0xff]
    %v429 = vld [vmem:[#allocation5 + $0xe8] sm:$0xff]
    %v430 = vld [vmem:[#allocation5 + $0xf0] sm:$0xff]
    %v431 = vld [vmem:[#allocation5 + $0xf8] sm:$0xff]
    %v432 = vld [vmem:[#allocation5 + $0x100] sm:$0xff]
    %v433 = vld [vmem:[#allocation5 + $0x108] sm:$0xff]
    %v434 = vld [vmem:[#allocation5 + $0x110] sm:$0xff]
    %v435 = vld [vmem:[#allocation5 + $0x118] sm:$0xff]
    %v436 = vld [vmem:[#allocation5 + $0x120] sm:$0xff]
    %v437 = vld [vmem:[#allocation5 + $0x128] sm:$0xff]
    %v438 = vld [vmem:[#allocation5 + $0x130] sm:$0xff]
    %v439 = vld [vmem:[#allocation5 + $0x138] sm:$0xff]
    %v440 = vld [vmem:[#allocation5 + $0x140] sm:$0xff]
    %v441 = vld [vmem:[#allocation5 + $0x148] sm:$0xff]
    %v442 = vld [vmem:[#allocation5 + $0x150] sm:$0xff]
    %v443 = vld [vmem:[#allocation5 + $0x158] sm:$0xff]
    %v444 = vld [vmem:[#allocation5 + $0x160] sm:$0xff]
    %v445 = vld [vmem:[#allocation5 + $0x168] sm:$0xff]
    %v446 = vld [vmem:[#allocation5 + $0x170] sm:$0xff]
    %v447 = vld [vmem:[#allocation5 + $0x178] sm:$0xff]
    %v448 = vld [vmem:[#allocation5 + $0x180] sm:$0xff]
    %v449 = vld [vmem:[#allocation5 + $0x188] sm:$0xff]
    %v450 = vld [vmem:[#allocation5 + $0x190] sm:$0xff]
    %v451 = vld [vmem:[#allocation5 + $0x198] sm:$0xff]
    %v452 = vld [vmem:[#allocation5 + $0x1a0] sm:$0xff]
    %v453 = vld [vmem:[#allocation5 + $0x1a8] sm:$0xff]
    %v454 = vld [vmem:[#allocation5 + $0x1b0] sm:$0xff]
    %v455 = vld [vmem:[#allocation5 + $0x1b8] sm:$0xff]
    %v456 = vld [vmem:[#allocation5 + $0x1c0] sm:$0xff]
    %v457 = vld [vmem:[#allocation5 + $0x1c8] sm:$0xff]
    %v458 = vld [vmem:[#allocation5 + $0x1d0] sm:$0xff]
    %v459 = vld [vmem:[#allocation5 + $0x1d8] sm:$0xff]
    %v460 = vld [vmem:[#allocation5 + $0x1e0] sm:$0xff]
    %v461 = vld [vmem:[#allocation5 + $0x1e8] sm:$0xff]
    %v462 = vld [vmem:[#allocation5 + $0x1f0] sm:$0xff]
    %v463 = vld [vmem:[#allocation5 + $0x1f8] sm:$0xff]
    %vm464 = vcmask 64512
    %v466 = vsel %vm464, %v359, 0
    %v469 = vsel %vm464, %v360, 0
    %471 = vmatpush.msra.mxu0 %v460
    %472 = vmatpush.msra.mxu0 %v456
    %473 = vmatpush.msra.mxu0 %v452
    %474 = vmatpush.msra.mxu0 %v448
    %475 = vmatpush.msra.mxu0 %v444
    %476 = vmatpush.msra.mxu0 %v440
    %477 = vmatpush.msra.mxu0 %v436
    %478 = vmatpush.msra.mxu0 %v432
    %479 = vmatpush.msra.mxu0 %v428
    %480 = vmatpush.msra.mxu0 %v424
    %481 = vmatpush.msra.mxu0 %v420
    %482 = vmatpush.msra.mxu0 %v416
    %483 = vmatpush.msra.mxu0 %v412
    %484 = vmatpush.msra.mxu0 %v408
    %485 = vmatpush.msra.mxu0 %v404
    %486 = vmatpush.msra.mxu0 %v400
    %487 = vmatmul.f32.gmra.mxu0 %v390
    %v488 = vpop.f32.mrf.mxu0
    %v489 = vadd.f32 0.0, %v488
    %490 = vmatmul.f32.gmra.mxu0 %v397
    %v491 = vpop.f32.mrf.mxu0
    %v492 = vadd.f32 0.0, %v491
    %493 = vdwg.mxu0
    %494 = vmatpush.msra.mxu0 0.0
    %495 = vmatpush.msra.mxu0 0.0
    %496 = vmatpush.msra.mxu0 0.0
    %497 = vmatpush.msra.mxu0 0.0
    %498 = vmatpush.msra.mxu0 0.0
    %499 = vmatpush.msra.mxu0 0.0
    %500 = vmatpush.msra.mxu0 0.0
    %501 = vmatpush.msra.mxu0 0.0
    %502 = vmatpush.msra.mxu0 0.0
    %503 = vmatpush.msra.mxu0 0.0
    %504 = vmatpush.msra.mxu0 0.0
    %505 = vmatpush.msra.mxu0 0.0
    %506 = vmatpush.msra.mxu0 0.0
    %507 = vmatpush.msra.mxu0 0.0
    %508 = vmatpush.msra.mxu0 0.0
    %509 = vmatpush.msra.mxu0 %v71
    %510 = vmatmul.f32.gmra.mxu0 %v466
    %v511 = vpop.f32.mrf.mxu0
    %v512 = vadd.f32 %v489, %v511
    %513 = vmatmul.f32.gmra.mxu0 %v469
    %v514 = vpop.f32.mrf.mxu0
    %v515 = vadd.f32 %v492, %v514
    %516 = vdwg.mxu0
    %517 = vmatpush.msra.mxu0 %v461
    %518 = vmatpush.msra.mxu0 %v457
    %519 = vmatpush.msra.mxu0 %v453
    %520 = vmatpush.msra.mxu0 %v449
    %521 = vmatpush.msra.mxu0 %v445
    %522 = vmatpush.msra.mxu0 %v441
    %523 = vmatpush.msra.mxu0 %v437
    %524 = vmatpush.msra.mxu0 %v433
    %525 = vmatpush.msra.mxu0 %v429
    %526 = vmatpush.msra.mxu0 %v425
    %527 = vmatpush.msra.mxu0 %v421
    %528 = vmatpush.msra.mxu0 %v417
    %529 = vmatpush.msra.mxu0 %v413
    %530 = vmatpush.msra.mxu0 %v409
    %531 = vmatpush.msra.mxu0 %v405
    %532 = vmatpush.msra.mxu0 %v401
    %533 = vmatmul.f32.gmra.mxu0 %v390
    %v534 = vpop.f32.mrf.mxu0
    %v535 = vadd.f32 0.0, %v534
    %536 = vmatmul.f32.gmra.mxu0 %v397
    %v537 = vpop.f32.mrf.mxu0
    %v538 = vadd.f32 0.0, %v537
    %539 = vdwg.mxu0
    %540 = vmatpush.msra.mxu0 0.0
    %541 = vmatpush.msra.mxu0 0.0
    %542 = vmatpush.msra.mxu0 0.0
    %543 = vmatpush.msra.mxu0 0.0
    %544 = vmatpush.msra.mxu0 0.0
    %545 = vmatpush.msra.mxu0 0.0
    %546 = vmatpush.msra.mxu0 0.0
    %547 = vmatpush.msra.mxu0 0.0
    %548 = vmatpush.msra.mxu0 0.0
    %549 = vmatpush.msra.mxu0 0.0
    %550 = vmatpush.msra.mxu0 0.0
    %551 = vmatpush.msra.mxu0 0.0
    %552 = vmatpush.msra.mxu0 0.0
    %553 = vmatpush.msra.mxu0 0.0
    %554 = vmatpush.msra.mxu0 0.0
    %555 = vmatpush.msra.mxu0 %v72
    %556 = vmatmul.f32.gmra.mxu0 %v466
    %v557 = vpop.f32.mrf.mxu0
    %v558 = vadd.f32 %v535, %v557
    %559 = vmatmul.f32.gmra.mxu0 %v469
    %v560 = vpop.f32.mrf.mxu0
    %v561 = vadd.f32 %v538, %v560
    %562 = vdwg.mxu0
    %563 = vmatpush.msra.mxu0 %v462
    %564 = vmatpush.msra.mxu0 %v458
    %565 = vmatpush.msra.mxu0 %v454
    %566 = vmatpush.msra.mxu0 %v450
    %567 = vmatpush.msra.mxu0 %v446
    %568 = vmatpush.msra.mxu0 %v442
    %569 = vmatpush.msra.mxu0 %v438
    %570 = vmatpush.msra.mxu0 %v434
    %571 = vmatpush.msra.mxu0 %v430
    %572 = vmatpush.msra.mxu0 %v426
    %573 = vmatpush.msra.mxu0 %v422
    %574 = vmatpush.msra.mxu0 %v418
    %575 = vmatpush.msra.mxu0 %v414
    %576 = vmatpush.msra.mxu0 %v410
    %577 = vmatpush.msra.mxu0 %v406
    %578 = vmatpush.msra.mxu0 %v402
    %579 = vmatmul.f32.gmra.mxu0 %v390
    %v580 = vpop.f32.mrf.mxu0
    %v581 = vadd.f32 0.0, %v580
    %582 = vmatmul.f32.gmra.mxu0 %v397
    %v583 = vpop.f32.mrf.mxu0
    %v584 = vadd.f32 0.0, %v583
    %585 = vdwg.mxu0
    %586 = vmatpush.msra.mxu0 0.0
    %587 = vmatpush.msra.mxu0 0.0
    %588 = vmatpush.msra.mxu0 0.0
    %589 = vmatpush.msra.mxu0 0.0
    %590 = vmatpush.msra.mxu0 0.0
    %591 = vmatpush.msra.mxu0 0.0
    %592 = vmatpush.msra.mxu0 0.0
    %593 = vmatpush.msra.mxu0 0.0
    %594 = vmatpush.msra.mxu0 0.0
    %595 = vmatpush.msra.mxu0 0.0
    %596 = vmatpush.msra.mxu0 0.0
    %597 = vmatpush.msra.mxu0 0.0
    %598 = vmatpush.msra.mxu0 0.0
    %599 = vmatpush.msra.mxu0 0.0
    %600 = vmatpush.msra.mxu0 0.0
    %601 = vmatpush.msra.mxu0 %v73
    %602 = vmatmul.f32.gmra.mxu0 %v466
    %v603 = vpop.f32.mrf.mxu0
    %v604 = vadd.f32 %v581, %v603
    %605 = vmatmul.f32.gmra.mxu0 %v469
    %v606 = vpop.f32.mrf.mxu0
    %v607 = vadd.f32 %v584, %v606
    %608 = vdwg.mxu0
    %609 = vmatpush.msra.mxu0 %v463
    %610 = vmatpush.msra.mxu0 %v459
    %611 = vmatpush.msra.mxu0 %v455
    %612 = vmatpush.msra.mxu0 %v451
    %613 = vmatpush.msra.mxu0 %v447
    %614 = vmatpush.msra.mxu0 %v443
    %615 = vmatpush.msra.mxu0 %v439
    %616 = vmatpush.msra.mxu0 %v435
    %617 = vmatpush.msra.mxu0 %v431
    %618 = vmatpush.msra.mxu0 %v427
    %619 = vmatpush.msra.mxu0 %v423
    %620 = vmatpush.msra.mxu0 %v419
    %621 = vmatpush.msra.mxu0 %v415
    %622 = vmatpush.msra.mxu0 %v411
    %623 = vmatpush.msra.mxu0 %v407
    %624 = vmatpush.msra.mxu0 %v403
    %625 = vmatmul.f32.gmra.mxu0 %v390
    %v626 = vpop.f32.mrf.mxu0
    %v627 = vadd.f32 0.0, %v626
    %628 = vmatmul.f32.gmra.mxu0 %v397
    %v629 = vpop.f32.mrf.mxu0
    %v630 = vadd.f32 0.0, %v629
    %631 = vdwg.mxu0
    %632 = vmatpush.msra.mxu0 0.0
    %633 = vmatpush.msra.mxu0 0.0
    %634 = vmatpush.msra.mxu0 0.0
    %635 = vmatpush.msra.mxu0 0.0
    %636 = vmatpush.msra.mxu0 0.0
    %637 = vmatpush.msra.mxu0 0.0
    %638 = vmatpush.msra.mxu0 0.0
    %639 = vmatpush.msra.mxu0 0.0
    %640 = vmatpush.msra.mxu0 0.0
    %641 = vmatpush.msra.mxu0 0.0
    %642 = vmatpush.msra.mxu0 0.0
    %643 = vmatpush.msra.mxu0 0.0
    %644 = vmatpush.msra.mxu0 0.0
    %645 = vmatpush.msra.mxu0 0.0
    %646 = vmatpush.msra.mxu0 0.0
    %647 = vmatpush.msra.mxu0 %v74
    %648 = vmatmul.f32.gmra.mxu0 %v466
    %v649 = vpop.f32.mrf.mxu0
    %v650 = vadd.f32 %v627, %v649
    %651 = vmatmul.f32.gmra.mxu0 %v469
    %v652 = vpop.f32.mrf.mxu0
    %v653 = vadd.f32 %v630, %v652
    %654 = vdwg.mxu0
    %v655 = vadd.f32 %v512, %v558
    %v656 = vadd.f32 %v655, %v604
    %v657 = vadd.f32 %v656, %v650
    %v658 = vadd.f32 %v657, %v515
    %v659 = vadd.f32 %v658, %v561
    %v660 = vadd.f32 %v659, %v607
    %v661 = vadd.f32 %v660, %v653
    %662 = vadd.xlane.f32.xlu0 %v661
    %v663 = vpop.xlane.xlu0 %662
    %v664 = vmul.f32 %v512, %v512
    %v665 = vmul.f32 %v558, %v558
    %v666 = vmul.f32 %v604, %v604
    %v667 = vmul.f32 %v650, %v650
    %v668 = vmul.f32 %v515, %v515
    %v669 = vmul.f32 %v561, %v561
    %v670 = vmul.f32 %v607, %v607
    %v671 = vmul.f32 %v653, %v653
    %v672 = vadd.f32 %v664, %v665
    %v673 = vadd.f32 %v672, %v666
    %v674 = vadd.f32 %v673, %v667
    %v675 = vadd.f32 %v674, %v668
    %v676 = vadd.f32 %v675, %v669
    %v677 = vadd.f32 %v676, %v670
    %v678 = vadd.f32 %v677, %v671
    %679 = vadd.xlane.f32.xlu0 %v678
    %v680 = vpop.xlane.xlu0 %679
    %v681 = vmul.f32 %v663, 0.0009765625
    %v682 = vmul.f32 %v680, 0.0009765625
    %v683 = vmul.f32 %v681, %v681
    %v684 = vsub.f32 %v682, %v683
    %v685 = vadd.f32 %v684, 1e-05
    %v686 = vrsqrt.pop %v685
    %v687 = vmul.f32 %v686, %v685
    %v688 = vmul.f32 %v687, %v686
    %v689 = vmul.f32 0.5, %v688
    %v690 = vsub.f32 1.5, %v689
    %v691 = vmul.f32 %v686, %v690
    %vm692 = vweird.f32 %v685
    %vm693 = vweird.f32 %v686
    %vm694 = vmor %vm692, %vm693
    %v695 = vsel %vm694, %v686, %v691
    %v696 = vld [vmem:[%s5] sm:$0xff]
    %s697 = scalar_lea.vmem %s5, 8
    %v698 = vld [vmem:[%s697] sm:$0xff]
    %v699 = vmul.f32 %v696, %v695
    %v700 = vmul.f32 %v681, %v699
    %v701 = vsub.f32 %v698, %v700
    %703 = vset.pattern.permute.xlu0 0
    %704 = vperm.xlu0 %703, %v699
    %v705 = vpop.permute.xlu0 %704
    %v707 = vmul.f32 %v512, %v705
    %v708 = vmul.f32 %v558, %v705
    %v709 = vmul.f32 %v604, %v705
    %v710 = vmul.f32 %v650, %v705
    %v711 = vmul.f32 %v515, %v705
    %v712 = vmul.f32 %v561, %v705
    %v713 = vmul.f32 %v607, %v705
    %v714 = vmul.f32 %v653, %v705
    %716 = vset.pattern.permute.xlu0 0
    %717 = vperm.xlu0 %716, %v701
    %v718 = vpop.permute.xlu0 %717
    %v720 = vadd.f32 %v707, %v718
    %v721 = vadd.f32 %v708, %v718
    %v722 = vadd.f32 %v709, %v718
    %v723 = vadd.f32 %v710, %v718
    %v724 = vadd.f32 %v711, %v718
    %v725 = vadd.f32 %v712, %v718
    %v726 = vadd.f32 %v713, %v718
    %v727 = vadd.f32 %v714, %v718
    %v728 = vmax.f32 %v720, 0.0
    %v729 = vmax.f32 %v721, 0.0
    %v730 = vmax.f32 %v722, 0.0
    %v731 = vmax.f32 %v723, 0.0
    %v732 = vmax.f32 %v724, 0.0
    %v733 = vmax.f32 %v725, 0.0
    %v734 = vmax.f32 %v726, 0.0
    %v735 = vmax.f32 %v727, 0.0
    %736 = vst [vmem:[#allocation8] sm:$0xff] %v728
    %737 = vst [vmem:[#allocation8 + $0x8] sm:$0xff] %v729
    %738 = vst [vmem:[#allocation8 + $0x10] sm:$0xff] %v730
    %739 = vst [vmem:[#allocation8 + $0x18] sm:$0xff] %v731
    %740 = vst [vmem:[#allocation8 + $0x20] sm:$0xff] %v732
    %741 = vst [vmem:[#allocation8 + $0x28] sm:$0xff] %v733
    %742 = vst [vmem:[#allocation8 + $0x30] sm:$0xff] %v734
    %743 = vst [vmem:[#allocation8 + $0x38] sm:$0xff] %v735
    // Predicated region
    $region38: #{tpu_custom_call.1} parent=1 // pred_check
      _
    $region39: #{tpu_custom_call.1} parent=1 // pred_check_branch
      %745 = sbr.rel (0) target = $region41
    $region40: #{tpu_custom_call.1} parent=1 // pred_region
      %747 = vsyncadd [#allocation4], 0
      %s748 = sshll.u32 [#allocation8], 4
      %s749 = int_to_ptr.vmem [resolvable:$true] %s748
      %s750 = sshll.u32 %s6, 4
      %s751 = int_to_ptr.hbm [resolvable:$true] %s750
      %756 = dma.vmem_to_hbm [thread:$0]  %s749, 1024, %s751, [#allocation4], 512, 512, 32
    $region41: #{tpu_custom_call.1} parent=1 // pred_fallthru
      _
    // Predicated region
    $region42: #{tpu_custom_call.1} parent=1 // pred_check
      _
    $region43: #{tpu_custom_call.1} parent=1 // pred_check_branch
      %758 = sbr.rel (0) target = $region45
    $region44: #{tpu_custom_call.1} parent=1 // pred_region
      %760 = dma.done [#allocation4], 1024
    $region45: #{tpu_custom_call.1} parent=1 // pred_fallthru
      _
    %761 = vsyncpa [#allocation3], 1
    %762 = vsyncpa [#allocation6], 1
    %763 = vsyncpa [#allocation4], 1

</llo_original>
